<compile_context>
chip_gen: v5e
topology: v5e:2x2
jax: 0.10.0
libtpu: 0.0.40
codegen_flags: <defaults>
</compile_context>

<pallas_src>
import functools

import jax
import jax.numpy as jnp
from jax import lax
from jax.experimental import pallas as pl
from jax.experimental.pallas import tpu as pltpu


def _dice_stats_kernel(preds_ref, masks_ref, out_ref,
                       inter_acc, sp2_acc, sm2_acc,
                       *, C, rows, chunk, hw, tiles_per_split,
                       mask_from_tile, tail_possible):
    # preds_ref: (C, rows, 128) native-dtype logits (batch dim squeezed away)
    # masks_ref: (rows, 128)    integer class ids (native dtype)
    # out_ref:   (1, 1, 3, C)   f32 per-(batch, split) partial stats
    # *_acc:     (C, chunk, 128) f32 -- one vreg per (stat, class)
    s = pl.program_id(1)
    i = pl.program_id(2)
    gtile = s * tiles_per_split + i            # global row-tile index (unclamped)

    @pl.when(i == 0)
    def _init():
        inter_acc[...] = jnp.zeros_like(inter_acc)
        sp2_acc[...] = jnp.zeros_like(sp2_acc)
        sm2_acc[...] = jnp.zeros_like(sm2_acc)

    def accumulate(masked):
        # For small C the 3*C accumulators stay register-resident across the
        # whole tile (one vreg each); for larger C fall back to per-chunk
        # read-modify-write on the tiny VMEM scratch.
        hold = C <= 8
        if hold:
            inter = [inter_acc[c] for c in range(C)]
            psq = [sp2_acc[c] for c in range(C)]
            cnt = [sm2_acc[c] for c in range(C)]

        for r0 in range(0, rows, chunk):
            ids = masks_ref[r0:r0 + chunk, :].astype(jnp.int32)
            p = [preds_ref[c, r0:r0 + chunk, :].astype(jnp.float32)
                 for c in range(C)]

            # softmax over classes: pure elementwise VALU work on dense vregs
            mx = p[0]
            for c in range(1, C):
                mx = jnp.maximum(mx, p[c])
            e = [jnp.exp(p[c] - mx) for c in range(C)]
            den = e[0]
            for c in range(1, C):
                den = den + e[c]
            # EUP approx reciprocal + one Newton step (otherwise-idle slot).
            inv = pl.reciprocal(den, approx=True)
            inv = inv * (2.0 - den * inv)

            if masked:
                flat = ((gtile * rows + r0) * 128
                        + lax.broadcasted_iota(jnp.int32, (chunk, 128), 0) * 128
                        + lax.broadcasted_iota(jnp.int32, (chunk, 128), 1))
                valid = flat < hw

            for c in range(C):
                prob = e[c] * inv
                hit = ids == c
                if masked:
                    hit = jnp.logical_and(hit, valid)
                    d_sq = jnp.where(valid, prob * prob, 0.0)
                else:
                    d_sq = prob * prob
                d_int = jnp.where(hit, prob, 0.0)
                d_cnt = hit.astype(jnp.float32)
                if hold:
                    inter[c] = inter[c] + d_int
                    psq[c] = psq[c] + d_sq
                    cnt[c] = cnt[c] + d_cnt
                else:
                    inter_acc[c] = inter_acc[c] + d_int
                    sp2_acc[c] = sp2_acc[c] + d_sq
                    sm2_acc[c] = sm2_acc[c] + d_cnt

        if hold:
            for c in range(C):
                inter_acc[c] = inter[c]
                sp2_acc[c] = psq[c]
                sm2_acc[c] = cnt[c]

    if tail_possible:
        needs_mask = gtile >= mask_from_tile

        @pl.when(needs_mask)
        def _tail():
            accumulate(True)

        @pl.when(jnp.logical_not(needs_mask))
        def _body():
            accumulate(False)
    else:
        accumulate(False)

    @pl.when(i == tiles_per_split - 1)
    def _finalize():
        def red(acc):                      # (C, chunk, 128) -> (C,)
            return jnp.sum(jnp.sum(acc[...], axis=-1), axis=-1)

        stats = jnp.stack([red(inter_acc), red(sp2_acc), red(sm2_acc)], axis=0)
        out_ref[...] = stats[None, None]   # (1, 1, 3, C)


@functools.partial(jax.jit,
                   static_argnames=("smooth", "target_block_bytes",
                                    "rows_per_tile"))
def dice_loss(preds, masks, smooth=1e-5, target_block_bytes=2 * 1024 * 1024,
              rows_per_tile=None):
    """Dice loss matching the PyTorch DiceLoss.forward.

    preds: [B, C, H, W] float logits (any float dtype; streamed natively)
    masks: [B, H, W]    integer class ids (streamed natively)
    """
    # TODO(synk): ignore_index is accepted by the PyTorch __init__ but unused
    # in its forward(); it is likewise unused here.
    B, C, H, W = preds.shape
    HW = H * W
    lanes = 128

    # Stream masks in their native dtype; only convert unsupported dtypes.
    if (not jnp.issubdtype(masks.dtype, jnp.integer)) or \
            jnp.dtype(masks.dtype).itemsize > 4:
        masks = masks.astype(jnp.int32)

    # Free reshape to a lane-dense (B, C, HW/128, 128) view.  Only when H*W is
    # not 128-aligned (rare for real segmentation shapes) do we pay one pad
    # pass; padded pixels are masked out in-kernel.
    HWp = pl.cdiv(HW, lanes) * lanes
    preds_r = preds.reshape(B, C, HW)
    masks_r = masks.reshape(B, HW)
    if HWp != HW:
        preds_r = jnp.pad(preds_r, ((0, 0), (0, 0), (0, HWp - HW)))
        masks_r = jnp.pad(masks_r, ((0, 0), (0, HWp - HW)))
    R = HWp // lanes
    preds_r = preds_r.reshape(B, C, R, lanes)
    masks_r = masks_r.reshape(B, R, lanes)

    itemsize = jnp.dtype(preds.dtype).itemsize
    mask_isize = jnp.dtype(masks.dtype).itemsize

    # Generation-aware VMEM budget (v5e/v6e: 128 MiB physical -> 64 MiB scoped;
    # v7x: 64 MiB -> 32 MiB scoped).
    try:
        vmem_cap = int(getattr(pltpu.get_tpu_info(), "vmem_capacity_bytes",
                               128 * 1024 * 1024))
    except Exception:
        vmem_cap = 128 * 1024 * 1024
    vmem_limit = int(min(max(vmem_cap // 2, 16 * 1024 * 1024),
                         64 * 1024 * 1024))

    # Rows per tile: target ~target_block_bytes of preds per grid step, sized
    # from C and the native itemsize (capped so the unrolled chunk loop and
    # VMEM footprint stay sane).
    if rows_per_tile is None:
        budget = min(target_block_bytes, vmem_limit // 8)
        rows = budget // (C * lanes * itemsize)
    else:
        rows = int(rows_per_tile)
    rows = max(1, min(rows, 1024))
    if R <= 8:
        rows = R                                  # full dim: always legal
    else:
        rows = max(8, (min(rows, R) // 8) * 8)    # keep (8,128) block alignment
    chunk = min(8, rows)

    n_real = pl.cdiv(R, rows)                     # real row tiles
    n_splits = 2 if (B == 1 and n_real >= 2) else 1   # v7x: 2 TCs even at B=1
    tps = pl.cdiv(n_real, n_splits)               # tiles per split
    mask_from_tile = HW // (rows * lanes)         # first tile with OOB pixels
    tail_possible = (n_splits * tps) > mask_from_tile
    last_block = n_real - 1

    # Keep vmem_limit above what we actually allocate (3 preds bufs + 2 masks
    # bufs + scratch + slack); no-op for normal shapes.
    need = (3 * C * rows * lanes * itemsize + 2 * rows * lanes * mask_isize
            + 3 * C * chunk * lanes * 4 + (2 << 20))
    vmem_limit = int(min(max(vmem_limit, need),
                         max(vmem_cap - (8 << 20), 16 << 20)))

    def preds_map(b, s, i):
        return (b, 0, jnp.minimum(s * tps + i, last_block), 0)

    def masks_map(b, s, i):
        return (b, jnp.minimum(s * tps + i, last_block), 0)

    preds_block = (pl.Squeezed(), C, rows, lanes)
    # Deeper buffering on the dominant stream once there are enough tiles to
    # pipeline; guarded so a BlockSpec without pipeline_mode falls back.
    preds_spec = None
    if tps >= 3 and hasattr(pl, "Buffered"):
        try:
            preds_spec = pl.BlockSpec(preds_block, preds_map,
                                      pipeline_mode=pl.Buffered(3))
        except TypeError:
            preds_spec = None
    if preds_spec is None:
        preds_spec = pl.BlockSpec(preds_block, preds_map)

    kernel = functools.partial(
        _dice_stats_kernel, C=C, rows=rows, chunk=chunk, hw=HW,
        tiles_per_split=tps, mask_from_tile=mask_from_tile,
        tail_possible=tail_possible)

    stats = pl.pallas_call(
        kernel,
        out_shape=jax.ShapeDtypeStruct((B, n_splits, 3, C), jnp.float32),
        grid_spec=pltpu.PrefetchScalarGridSpec(
            num_scalar_prefetch=0,
            grid=(B, n_splits, tps),
            in_specs=[
                preds_spec,
                pl.BlockSpec((pl.Squeezed(), rows, lanes), masks_map),
            ],
            out_specs=pl.BlockSpec((1, 1, 3, C), lambda b, s, i: (b, s, 0, 0)),
            scratch_shapes=[
                pltpu.VMEM((C, chunk, lanes), jnp.float32),
                pltpu.VMEM((C, chunk, lanes), jnp.float32),
                pltpu.VMEM((C, chunk, lanes), jnp.float32),
            ],
        ),
        compiler_params=pltpu.CompilerParams(
            dimension_semantics=("parallel", "parallel", "arbitrary"),
            vmem_limit_bytes=vmem_limit,
        ),
    )(preds_r, masks_r)

    stats = jnp.sum(stats, axis=(0, 1))            # (3, C)
    intersection = stats[0]
    union = stats[1] + stats[2]
    dice_score = 2.0 * intersection / (union + smooth)
    return jnp.mean(1.0 - dice_score)


def _dice_loss_ref(preds, masks, smooth=1e-5):
    """Pure-JAX reference mirroring the PyTorch forward."""
    preds = jax.nn.softmax(preds.astype(jnp.float32), axis=1)
    num_classes = preds.shape[1]
    onehot = jax.nn.one_hot(masks, num_classes, dtype=jnp.float32)  # [B,H,W,C]
    onehot = jnp.transpose(onehot, (0, 3, 1, 2))                    # [B,C,H,W]
    intersection = jnp.sum(preds * onehot, axis=(0, 2, 3))
    union = (jnp.sum(preds * preds, axis=(0, 2, 3))
             + jnp.sum(onehot * onehot, axis=(0, 2, 3)))
    dice_score = 2.0 * intersection / (union + smooth)
    return jnp.mean(1.0 - dice_score)


def _check(name, got, want, atol=1e-4, rtol=1e-4):
    # Tolerance is slightly looser than exact f32 parity because the kernel's
    # softmax denominator uses the EUP approx reciprocal + one Newton step
    # (perf-review item); observed error is ~1e-6.
    assert jnp.allclose(got, want, atol=atol, rtol=rtol), (name, got, want)


if __name__ == "__main__":
    key = jax.random.PRNGKey(0)

    # 1) main path: single tile per batch, no masking, f32 logits
    B, C, H, W = 2, 4, 16, 16
    k1, k2, key = jax.random.split(key, 3)
    preds = jax.random.normal(k1, (B, C, H, W), dtype=jnp.float32)
    masks = jax.random.randint(k2, (B, H, W), 0, C, dtype=jnp.int32)
    loss = dice_loss(preds, masks)
    jax.block_until_ready(loss)
    _check("single-tile", loss, _dice_loss_ref(preds, masks))

    # 2) bf16 logits streamed natively (in-kernel upcast)
    loss_bf16 = dice_loss(preds.astype(jnp.bfloat16), masks)
    jax.block_until_ready(loss_bf16)
    _check("bf16", loss_bf16, _dice_loss_ref(preds.astype(jnp.bfloat16), masks))

    # 3) multi-tile accumulation with a row-ragged last tile (H*W=2304, R=18)
    k1, k2, key = jax.random.split(key, 3)
    preds48 = jax.random.normal(k1, (2, 4, 48, 48), dtype=jnp.float32)
    masks48 = jax.random.randint(k2, (2, 48, 48), 0, 4, dtype=jnp.int32)
    loss48 = dice_loss(preds48, masks48, rows_per_tile=8)
    jax.block_until_ready(loss48)
    _check("multi-tile", loss48, _dice_loss_ref(preds48, masks48))

    # 4) B=1: split row-tile range into two 'parallel' slices (v7x 2-TC item)
    loss_b1 = dice_loss(preds48[:1], masks48[:1], rows_per_tile=8)
    jax.block_until_ready(loss_b1)
    _check("b1-split", loss_b1, _dice_loss_ref(preds48[:1], masks48[:1]))

    # 5) H*W not 128-aligned (400 -> padded to 512) + odd class count
    k1, k2, key = jax.random.split(key, 3)
    preds20 = jax.random.normal(k1, (2, 5, 20, 20), dtype=jnp.float32)
    masks20 = jax.random.randint(k2, (2, 20, 20), 0, 5, dtype=jnp.int32)
    loss20 = dice_loss(preds20, masks20)
    jax.block_until_ready(loss20)
    _check("ragged-hw", loss20, _dice_loss_ref(preds20, masks20))

    # 6) C > 8 path (per-chunk scratch accumulation instead of vreg-resident)
    k1, k2, key = jax.random.split(key, 3)
    preds12 = jax.random.normal(k1, (2, 12, 16, 16), dtype=jnp.float32)
    masks12 = jax.random.randint(k2, (2, 16, 16), 0, 12, dtype=jnp.int32)
    loss12 = dice_loss(preds12, masks12)
    jax.block_until_ready(loss12)
    _check("wide-c", loss12, _dice_loss_ref(preds12, masks12))

    print("KERNEL_OK")
</pallas_src>

<mosaic_0001>
module attributes {stable_mosaic.version = 11 : i64} {
  func.func @_dice_stats_kernel(%arg0: i32, %arg1: i32, %arg2: i32, %arg3: memref<1x4x2x128xf32, #tpu.memory_space<vmem>>, %arg4: memref<1x2x128xi32, #tpu.memory_space<vmem>>, %arg5: memref<1x1x3x4xf32, #tpu.memory_space<vmem>>, %arg6: memref<4x2x128xf32, #tpu.memory_space<vmem>>, %arg7: memref<4x2x128xf32, #tpu.memory_space<vmem>>, %arg8: memref<4x2x128xf32, #tpu.memory_space<vmem>>) attributes {dimension_semantics = [#tpu.dimension_semantics<parallel>, #tpu.dimension_semantics<parallel>, #tpu.dimension_semantics<arbitrary>], iteration_bounds = array<i64: 2, 1, 1>, scalar_prefetch = 0 : i64, scratch_operands = 3 : i64, tpu.core_type = #tpu.core_type<tc>, window_params = [{transform_indices = @transform_0, window_bounds = array<i64: 1, 4, 2, 128>}, {transform_indices = @transform_1, window_bounds = array<i64: 1, 2, 128>}, {transform_indices = @transform_2, window_bounds = array<i64: 1, 1, 3, 4>}]} {
    %c0_i32 = arith.constant 0 : i32
    %0 = arith.cmpi eq, %arg2, %c0_i32 : i32
    %1 = arith.extui %0 : i1 to i32
    %c0_i32_0 = arith.constant 0 : i32
    %2 = arith.cmpi ne, %1, %c0_i32_0 : i32
    scf.if %2 {
      %cst_95 = arith.constant 0.000000e+00 : f32
      %139 = vector.broadcast %cst_95 : f32 to vector<4x2x128xf32>
      %c0_96 = arith.constant 0 : index
      %c0_97 = arith.constant 0 : index
      %c0_98 = arith.constant 0 : index
      %140 = vector.load %arg6[%c0_96, %c0_97, %c0_98] : memref<4x2x128xf32, #tpu.memory_space<vmem>>, vector<4x2x128xf32>
      tpu.vector_store %arg6[%c0_96, %c0_97, %c0_98], %139 {strides = array<i32>} : memref<4x2x128xf32, #tpu.memory_space<vmem>>, vector<4x2x128xf32>,
      %cst_99 = arith.constant 0.000000e+00 : f32
      %141 = vector.broadcast %cst_99 : f32 to vector<4x2x128xf32>
      %c0_100 = arith.constant 0 : index
      %c0_101 = arith.constant 0 : index
      %c0_102 = arith.constant 0 : index
      %142 = vector.load %arg7[%c0_100, %c0_101, %c0_102] : memref<4x2x128xf32, #tpu.memory_space<vmem>>, vector<4x2x128xf32>
      tpu.vector_store %arg7[%c0_100, %c0_101, %c0_102], %141 {strides = array<i32>} : memref<4x2x128xf32, #tpu.memory_space<vmem>>, vector<4x2x128xf32>,
      %cst_103 = arith.constant 0.000000e+00 : f32
      %143 = vector.broadcast %cst_103 : f32 to vector<4x2x128xf32>
      %c0_104 = arith.constant 0 : index
      %c0_105 = arith.constant 0 : index
      %c0_106 = arith.constant 0 : index
      %144 = vector.load %arg8[%c0_104, %c0_105, %c0_106] : memref<4x2x128xf32, #tpu.memory_space<vmem>>, vector<4x2x128xf32>
      tpu.vector_store %arg8[%c0_104, %c0_105, %c0_106], %143 {strides = array<i32>} : memref<4x2x128xf32, #tpu.memory_space<vmem>>, vector<4x2x128xf32>,
    } else {
    }
    %c0 = arith.constant 0 : index
    %c0_1 = arith.constant 0 : index
    %c0_2 = arith.constant 0 : index
    %3 = vector.load %arg6[%c0, %c0_1, %c0_2] : memref<4x2x128xf32, #tpu.memory_space<vmem>>, vector<1x2x128xf32>
    %4 = vector.shape_cast %3 : vector<1x2x128xf32> to vector<2x128xf32>
    %c1 = arith.constant 1 : index
    %c0_3 = arith.constant 0 : index
    %c0_4 = arith.constant 0 : index
    %5 = vector.load %arg6[%c1, %c0_3, %c0_4] : memref<4x2x128xf32, #tpu.memory_space<vmem>>, vector<1x2x128xf32>
    %6 = vector.shape_cast %5 : vector<1x2x128xf32> to vector<2x128xf32>
    %c2 = arith.constant 2 : index
    %c0_5 = arith.constant 0 : index
    %c0_6 = arith.constant 0 : index
    %7 = vector.load %arg6[%c2, %c0_5, %c0_6] : memref<4x2x128xf32, #tpu.memory_space<vmem>>, vector<1x2x128xf32>
    %8 = vector.shape_cast %7 : vector<1x2x128xf32> to vector<2x128xf32>
    %c3 = arith.constant 3 : index
    %c0_7 = arith.constant 0 : index
    %c0_8 = arith.constant 0 : index
    %9 = vector.load %arg6[%c3, %c0_7, %c0_8] : memref<4x2x128xf32, #tpu.memory_space<vmem>>, vector<1x2x128xf32>
    %10 = vector.shape_cast %9 : vector<1x2x128xf32> to vector<2x128xf32>
    %c0_9 = arith.constant 0 : index
    %c0_10 = arith.constant 0 : index
    %c0_11 = arith.constant 0 : index
    %11 = vector.load %arg7[%c0_9, %c0_10, %c0_11] : memref<4x2x128xf32, #tpu.memory_space<vmem>>, vector<1x2x128xf32>
    %12 = vector.shape_cast %11 : vector<1x2x128xf32> to vector<2x128xf32>
    %c1_12 = arith.constant 1 : index
    %c0_13 = arith.constant 0 : index
    %c0_14 = arith.constant 0 : index
    %13 = vector.load %arg7[%c1_12, %c0_13, %c0_14] : memref<4x2x128xf32, #tpu.memory_space<vmem>>, vector<1x2x128xf32>
    %14 = vector.shape_cast %13 : vector<1x2x128xf32> to vector<2x128xf32>
    %c2_15 = arith.constant 2 : index
    %c0_16 = arith.constant 0 : index
    %c0_17 = arith.constant 0 : index
    %15 = vector.load %arg7[%c2_15, %c0_16, %c0_17] : memref<4x2x128xf32, #tpu.memory_space<vmem>>, vector<1x2x128xf32>
    %16 = vector.shape_cast %15 : vector<1x2x128xf32> to vector<2x128xf32>
    %c3_18 = arith.constant 3 : index
    %c0_19 = arith.constant 0 : index
    %c0_20 = arith.constant 0 : index
    %17 = vector.load %arg7[%c3_18, %c0_19, %c0_20] : memref<4x2x128xf32, #tpu.memory_space<vmem>>, vector<1x2x128xf32>
    %18 = vector.shape_cast %17 : vector<1x2x128xf32> to vector<2x128xf32>
    %c0_21 = arith.constant 0 : index
    %c0_22 = arith.constant 0 : index
    %c0_23 = arith.constant 0 : index
    %19 = vector.load %arg8[%c0_21, %c0_22, %c0_23] : memref<4x2x128xf32, #tpu.memory_space<vmem>>, vector<1x2x128xf32>
    %20 = vector.shape_cast %19 : vector<1x2x128xf32> to vector<2x128xf32>
    %c1_24 = arith.constant 1 : index
    %c0_25 = arith.constant 0 : index
    %c0_26 = arith.constant 0 : index
    %21 = vector.load %arg8[%c1_24, %c0_25, %c0_26] : memref<4x2x128xf32, #tpu.memory_space<vmem>>, vector<1x2x128xf32>
    %22 = vector.shape_cast %21 : vector<1x2x128xf32> to vector<2x128xf32>
    %c2_27 = arith.constant 2 : index
    %c0_28 = arith.constant 0 : index
    %c0_29 = arith.constant 0 : index
    %23 = vector.load %arg8[%c2_27, %c0_28, %c0_29] : memref<4x2x128xf32, #tpu.memory_space<vmem>>, vector<1x2x128xf32>
    %24 = vector.shape_cast %23 : vector<1x2x128xf32> to vector<2x128xf32>
    %c3_30 = arith.constant 3 : index
    %c0_31 = arith.constant 0 : index
    %c0_32 = arith.constant 0 : index
    %25 = vector.load %arg8[%c3_30, %c0_31, %c0_32] : memref<4x2x128xf32, #tpu.memory_space<vmem>>, vector<1x2x128xf32>
    %26 = vector.shape_cast %25 : vector<1x2x128xf32> to vector<2x128xf32>
    %c0_33 = arith.constant 0 : index
    %c0_34 = arith.constant 0 : index
    %c0_35 = arith.constant 0 : index
    %27 = vector.load %arg4[%c0_33, %c0_34, %c0_35] : memref<1x2x128xi32, #tpu.memory_space<vmem>>, vector<1x2x128xi32>
    %28 = vector.shape_cast %27 : vector<1x2x128xi32> to vector<2x128xi32>
    %c0_36 = arith.constant 0 : index
    %c0_37 = arith.constant 0 : index
    %c0_38 = arith.constant 0 : index
    %c0_39 = arith.constant 0 : index
    %29 = vector.load %arg3[%c0_36, %c0_37, %c0_38, %c0_39] : memref<1x4x2x128xf32, #tpu.memory_space<vmem>>, vector<1x1x2x128xf32>
    %30 = vector.shape_cast %29 : vector<1x1x2x128xf32> to vector<2x128xf32>
    %c0_40 = arith.constant 0 : index
    %c1_41 = arith.constant 1 : index
    %c0_42 = arith.constant 0 : index
    %c0_43 = arith.constant 0 : index
    %31 = vector.load %arg3[%c0_40, %c1_41, %c0_42, %c0_43] : memref<1x4x2x128xf32, #tpu.memory_space<vmem>>, vector<1x1x2x128xf32>
    %32 = vector.shape_cast %31 : vector<1x1x2x128xf32> to vector<2x128xf32>
    %c0_44 = arith.constant 0 : index
    %c2_45 = arith.constant 2 : index
    %c0_46 = arith.constant 0 : index
    %c0_47 = arith.constant 0 : index
    %33 = vector.load %arg3[%c0_44, %c2_45, %c0_46, %c0_47] : memref<1x4x2x128xf32, #tpu.memory_space<vmem>>, vector<1x1x2x128xf32>
    %34 = vector.shape_cast %33 : vector<1x1x2x128xf32> to vector<2x128xf32>
    %c0_48 = arith.constant 0 : index
    %c3_49 = arith.constant 3 : index
    %c0_50 = arith.constant 0 : index
    %c0_51 = arith.constant 0 : index
    %35 = vector.load %arg3[%c0_48, %c3_49, %c0_50, %c0_51] : memref<1x4x2x128xf32, #tpu.memory_space<vmem>>, vector<1x1x2x128xf32>
    %36 = vector.shape_cast %35 : vector<1x1x2x128xf32> to vector<2x128xf32>
    %37 = arith.maximumf %30, %32 : vector<2x128xf32>
    %38 = arith.maximumf %37, %34 : vector<2x128xf32>
    %39 = arith.maximumf %38, %36 : vector<2x128xf32>
    %40 = arith.subf %30, %39 : vector<2x128xf32>
    %41 = math.exp %40 : vector<2x128xf32>
    %42 = arith.subf %32, %39 : vector<2x128xf32>
    %43 = math.exp %42 : vector<2x128xf32>
    %44 = arith.subf %34, %39 : vector<2x128xf32>
    %45 = math.exp %44 : vector<2x128xf32>
    %46 = arith.subf %36, %39 : vector<2x128xf32>
    %47 = math.exp %46 : vector<2x128xf32>
    %48 = arith.addf %41, %43 : vector<2x128xf32>
    %49 = arith.addf %48, %45 : vector<2x128xf32>
    %50 = arith.addf %49, %47 : vector<2x128xf32>
    %51 = tpu.reciprocal %50 {approx = true} : vector<2x128xf32> -> vector<2x128xf32>
    %52 = arith.mulf %50, %51 : vector<2x128xf32>
    %cst = arith.constant 2.000000e+00 : f32
    %53 = vector.broadcast %cst : f32 to vector<2x128xf32>
    %54 = arith.subf %53, %52 : vector<2x128xf32>
    %55 = arith.mulf %51, %54 : vector<2x128xf32>
    %56 = arith.mulf %41, %55 : vector<2x128xf32>
    %c0_i32_52 = arith.constant 0 : i32
    %57 = vector.broadcast %c0_i32_52 : i32 to vector<2x128xi32>
    %58 = arith.cmpi eq, %28, %57 : vector<2x128xi32>
    %59 = arith.mulf %56, %56 : vector<2x128xf32>
    %cst_53 = arith.constant 0.000000e+00 : f32
    %60 = vector.broadcast %cst_53 : f32 to vector<2x128xf32>
    %61 = arith.select %58, %56, %60 : vector<2x128xi1>, vector<2x128xf32>
    %62 = arith.extui %58 : vector<2x128xi1> to vector<2x128xi32>
    %63 = arith.sitofp %62 : vector<2x128xi32> to vector<2x128xf32>
    %64 = arith.addf %4, %61 : vector<2x128xf32>
    %65 = arith.addf %12, %59 : vector<2x128xf32>
    %66 = arith.addf %20, %63 : vector<2x128xf32>
    %67 = arith.mulf %43, %55 : vector<2x128xf32>
    %c1_i32 = arith.constant 1 : i32
    %68 = vector.broadcast %c1_i32 : i32 to vector<2x128xi32>
    %69 = arith.cmpi eq, %28, %68 : vector<2x128xi32>
    %70 = arith.mulf %67, %67 : vector<2x128xf32>
    %cst_54 = arith.constant 0.000000e+00 : f32
    %71 = vector.broadcast %cst_54 : f32 to vector<2x128xf32>
    %72 = arith.select %69, %67, %71 : vector<2x128xi1>, vector<2x128xf32>
    %73 = arith.extui %69 : vector<2x128xi1> to vector<2x128xi32>
    %74 = arith.sitofp %73 : vector<2x128xi32> to vector<2x128xf32>
    %75 = arith.addf %6, %72 : vector<2x128xf32>
    %76 = arith.addf %14, %70 : vector<2x128xf32>
    %77 = arith.addf %22, %74 : vector<2x128xf32>
    %78 = arith.mulf %45, %55 : vector<2x128xf32>
    %c2_i32 = arith.constant 2 : i32
    %79 = vector.broadcast %c2_i32 : i32 to vector<2x128xi32>
    %80 = arith.cmpi eq, %28, %79 : vector<2x128xi32>
    %81 = arith.mulf %78, %78 : vector<2x128xf32>
    %cst_55 = arith.constant 0.000000e+00 : f32
    %82 = vector.broadcast %cst_55 : f32 to vector<2x128xf32>
    %83 = arith.select %80, %78, %82 : vector<2x128xi1>, vector<2x128xf32>
    %84 = arith.extui %80 : vector<2x128xi1> to vector<2x128xi32>
    %85 = arith.sitofp %84 : vector<2x128xi32> to vector<2x128xf32>
    %86 = arith.addf %8, %83 : vector<2x128xf32>
    %87 = arith.addf %16, %81 : vector<2x128xf32>
    %88 = arith.addf %24, %85 : vector<2x128xf32>
    %89 = arith.mulf %47, %55 : vector<2x128xf32>
    %c3_i32 = arith.constant 3 : i32
    %90 = vector.broadcast %c3_i32 : i32 to vector<2x128xi32>
    %91 = arith.cmpi eq, %28, %90 : vector<2x128xi32>
    %92 = arith.mulf %89, %89 : vector<2x128xf32>
    %cst_56 = arith.constant 0.000000e+00 : f32
    %93 = vector.broadcast %cst_56 : f32 to vector<2x128xf32>
    %94 = arith.select %91, %89, %93 : vector<2x128xi1>, vector<2x128xf32>
    %95 = arith.extui %91 : vector<2x128xi1> to vector<2x128xi32>
    %96 = arith.sitofp %95 : vector<2x128xi32> to vector<2x128xf32>
    %97 = arith.addf %10, %94 : vector<2x128xf32>
    %98 = arith.addf %18, %92 : vector<2x128xf32>
    %99 = arith.addf %26, %96 : vector<2x128xf32>
    %c0_57 = arith.constant 0 : index
    %c0_58 = arith.constant 0 : index
    %c0_59 = arith.constant 0 : index
    %100 = vector.load %arg6[%c0_57, %c0_58, %c0_59] : memref<4x2x128xf32, #tpu.memory_space<vmem>>, vector<1x2x128xf32>
    %101 = vector.shape_cast %100 : vector<1x2x128xf32> to vector<2x128xf32>
    %102 = vector.shape_cast %64 : vector<2x128xf32> to vector<1x2x128xf32>
    tpu.vector_store %arg6[%c0_57, %c0_58, %c0_59], %102 {strides = array<i32>} : memref<4x2x128xf32, #tpu.memory_space<vmem>>, vector<1x2x128xf32>,
    %c0_60 = arith.constant 0 : index
    %c0_61 = arith.constant 0 : index
    %c0_62 = arith.constant 0 : index
    %103 = vector.load %arg7[%c0_60, %c0_61, %c0_62] : memref<4x2x128xf32, #tpu.memory_space<vmem>>, vector<1x2x128xf32>
    %104 = vector.shape_cast %103 : vector<1x2x128xf32> to vector<2x128xf32>
    %105 = vector.shape_cast %65 : vector<2x128xf32> to vector<1x2x128xf32>
    tpu.vector_store %arg7[%c0_60, %c0_61, %c0_62], %105 {strides = array<i32>} : memref<4x2x128xf32, #tpu.memory_space<vmem>>, vector<1x2x128xf32>,
    %c0_63 = arith.constant 0 : index
    %c0_64 = arith.constant 0 : index
    %c0_65 = arith.constant 0 : index
    %106 = vector.load %arg8[%c0_63, %c0_64, %c0_65] : memref<4x2x128xf32, #tpu.memory_space<vmem>>, vector<1x2x128xf32>
    %107 = vector.shape_cast %106 : vector<1x2x128xf32> to vector<2x128xf32>
    %108 = vector.shape_cast %66 : vector<2x128xf32> to vector<1x2x128xf32>
    tpu.vector_store %arg8[%c0_63, %c0_64, %c0_65], %108 {strides = array<i32>} : memref<4x2x128xf32, #tpu.memory_space<vmem>>, vector<1x2x128xf32>,
    %c1_66 = arith.constant 1 : index
    %c0_67 = arith.constant 0 : index
    %c0_68 = arith.constant 0 : index
    %109 = vector.load %arg6[%c1_66, %c0_67, %c0_68] : memref<4x2x128xf32, #tpu.memory_space<vmem>>, vector<1x2x128xf32>
    %110 = vector.shape_cast %109 : vector<1x2x128xf32> to vector<2x128xf32>
    %111 = vector.shape_cast %75 : vector<2x128xf32> to vector<1x2x128xf32>
    tpu.vector_store %arg6[%c1_66, %c0_67, %c0_68], %111 {strides = array<i32>} : memref<4x2x128xf32, #tpu.memory_space<vmem>>, vector<1x2x128xf32>,
    %c1_69 = arith.constant 1 : index
    %c0_70 = arith.constant 0 : index
    %c0_71 = arith.constant 0 : index
    %112 = vector.load %arg7[%c1_69, %c0_70, %c0_71] : memref<4x2x128xf32, #tpu.memory_space<vmem>>, vector<1x2x128xf32>
    %113 = vector.shape_cast %112 : vector<1x2x128xf32> to vector<2x128xf32>
    %114 = vector.shape_cast %76 : vector<2x128xf32> to vector<1x2x128xf32>
    tpu.vector_store %arg7[%c1_69, %c0_70, %c0_71], %114 {strides = array<i32>} : memref<4x2x128xf32, #tpu.memory_space<vmem>>, vector<1x2x128xf32>,
    %c1_72 = arith.constant 1 : index
    %c0_73 = arith.constant 0 : index
    %c0_74 = arith.constant 0 : index
    %115 = vector.load %arg8[%c1_72, %c0_73, %c0_74] : memref<4x2x128xf32, #tpu.memory_space<vmem>>, vector<1x2x128xf32>
    %116 = vector.shape_cast %115 : vector<1x2x128xf32> to vector<2x128xf32>
    %117 = vector.shape_cast %77 : vector<2x128xf32> to vector<1x2x128xf32>
    tpu.vector_store %arg8[%c1_72, %c0_73, %c0_74], %117 {strides = array<i32>} : memref<4x2x128xf32, #tpu.memory_space<vmem>>, vector<1x2x128xf32>,
    %c2_75 = arith.constant 2 : index
    %c0_76 = arith.constant 0 : index
    %c0_77 = arith.constant 0 : index
    %118 = vector.load %arg6[%c2_75, %c0_76, %c0_77] : memref<4x2x128xf32, #tpu.memory_space<vmem>>, vector<1x2x128xf32>
    %119 = vector.shape_cast %118 : vector<1x2x128xf32> to vector<2x128xf32>
    %120 = vector.shape_cast %86 : vector<2x128xf32> to vector<1x2x128xf32>
    tpu.vector_store %arg6[%c2_75, %c0_76, %c0_77], %120 {strides = array<i32>} : memref<4x2x128xf32, #tpu.memory_space<vmem>>, vector<1x2x128xf32>,
    %c2_78 = arith.constant 2 : index
    %c0_79 = arith.constant 0 : index
    %c0_80 = arith.constant 0 : index
    %121 = vector.load %arg7[%c2_78, %c0_79, %c0_80] : memref<4x2x128xf32, #tpu.memory_space<vmem>>, vector<1x2x128xf32>
    %122 = vector.shape_cast %121 : vector<1x2x128xf32> to vector<2x128xf32>
    %123 = vector.shape_cast %87 : vector<2x128xf32> to vector<1x2x128xf32>
    tpu.vector_store %arg7[%c2_78, %c0_79, %c0_80], %123 {strides = array<i32>} : memref<4x2x128xf32, #tpu.memory_space<vmem>>, vector<1x2x128xf32>,
    %c2_81 = arith.constant 2 : index
    %c0_82 = arith.constant 0 : index
    %c0_83 = arith.constant 0 : index
    %124 = vector.load %arg8[%c2_81, %c0_82, %c0_83] : memref<4x2x128xf32, #tpu.memory_space<vmem>>, vector<1x2x128xf32>
    %125 = vector.shape_cast %124 : vector<1x2x128xf32> to vector<2x128xf32>
    %126 = vector.shape_cast %88 : vector<2x128xf32> to vector<1x2x128xf32>
    tpu.vector_store %arg8[%c2_81, %c0_82, %c0_83], %126 {strides = array<i32>} : memref<4x2x128xf32, #tpu.memory_space<vmem>>, vector<1x2x128xf32>,
    %c3_84 = arith.constant 3 : index
    %c0_85 = arith.constant 0 : index
    %c0_86 = arith.constant 0 : index
    %127 = vector.load %arg6[%c3_84, %c0_85, %c0_86] : memref<4x2x128xf32, #tpu.memory_space<vmem>>, vector<1x2x128xf32>
    %128 = vector.shape_cast %127 : vector<1x2x128xf32> to vector<2x128xf32>
    %129 = vector.shape_cast %97 : vector<2x128xf32> to vector<1x2x128xf32>
    tpu.vector_store %arg6[%c3_84, %c0_85, %c0_86], %129 {strides = array<i32>} : memref<4x2x128xf32, #tpu.memory_space<vmem>>, vector<1x2x128xf32>,
    %c3_87 = arith.constant 3 : index
    %c0_88 = arith.constant 0 : index
    %c0_89 = arith.constant 0 : index
    %130 = vector.load %arg7[%c3_87, %c0_88, %c0_89] : memref<4x2x128xf32, #tpu.memory_space<vmem>>, vector<1x2x128xf32>
    %131 = vector.shape_cast %130 : vector<1x2x128xf32> to vector<2x128xf32>
    %132 = vector.shape_cast %98 : vector<2x128xf32> to vector<1x2x128xf32>
    tpu.vector_store %arg7[%c3_87, %c0_88, %c0_89], %132 {strides = array<i32>} : memref<4x2x128xf32, #tpu.memory_space<vmem>>, vector<1x2x128xf32>,
    %c3_90 = arith.constant 3 : index
    %c0_91 = arith.constant 0 : index
    %c0_92 = arith.constant 0 : index
    %133 = vector.load %arg8[%c3_90, %c0_91, %c0_92] : memref<4x2x128xf32, #tpu.memory_space<vmem>>, vector<1x2x128xf32>
    %134 = vector.shape_cast %133 : vector<1x2x128xf32> to vector<2x128xf32>
    %135 = vector.shape_cast %99 : vector<2x128xf32> to vector<1x2x128xf32>
    tpu.vector_store %arg8[%c3_90, %c0_91, %c0_92], %135 {strides = array<i32>} : memref<4x2x128xf32, #tpu.memory_space<vmem>>, vector<1x2x128xf32>,
    %c0_i32_93 = arith.constant 0 : i32
    %136 = arith.cmpi eq, %arg2, %c0_i32_93 : i32
    %137 = arith.extui %136 : i1 to i32
    %c0_i32_94 = arith.constant 0 : i32
    %138 = arith.cmpi ne, %137, %c0_i32_94 : i32
    scf.if %138 {
      %c0_95 = arith.constant 0 : index
      %c0_96 = arith.constant 0 : index
      %c0_97 = arith.constant 0 : index
      %139 = vector.load %arg6[%c0_95, %c0_96, %c0_97] : memref<4x2x128xf32, #tpu.memory_space<vmem>>, vector<4x2x128xf32>
      %cst_98 = arith.constant dense<0.000000e+00> : vector<4x2xf32>
      %140 = vector.multi_reduction <add>, %139, %cst_98 [2] : vector<4x2x128xf32> to vector<4x2xf32>
      %cst_99 = arith.constant dense<0.000000e+00> : vector<4xf32>
      %141 = vector.multi_reduction <add>, %140, %cst_99 [1] : vector<4x2xf32> to vector<4xf32>
      %c0_100 = arith.constant 0 : index
      %c0_101 = arith.constant 0 : index
      %c0_102 = arith.constant 0 : index
      %142 = vector.load %arg7[%c0_100, %c0_101, %c0_102] : memref<4x2x128xf32, #tpu.memory_space<vmem>>, vector<4x2x128xf32>
      %cst_103 = arith.constant dense<0.000000e+00> : vector<4x2xf32>
      %143 = vector.multi_reduction <add>, %142, %cst_103 [2] : vector<4x2x128xf32> to vector<4x2xf32>
      %cst_104 = arith.constant dense<0.000000e+00> : vector<4xf32>
      %144 = vector.multi_reduction <add>, %143, %cst_104 [1] : vector<4x2xf32> to vector<4xf32>
      %c0_105 = arith.constant 0 : index
      %c0_106 = arith.constant 0 : index
      %c0_107 = arith.constant 0 : index
      %145 = vector.load %arg8[%c0_105, %c0_106, %c0_107] : memref<4x2x128xf32, #tpu.memory_space<vmem>>, vector<4x2x128xf32>
      %cst_108 = arith.constant dense<0.000000e+00> : vector<4x2xf32>
      %146 = vector.multi_reduction <add>, %145, %cst_108 [2] : vector<4x2x128xf32> to vector<4x2xf32>
      %cst_109 = arith.constant dense<0.000000e+00> : vector<4xf32>
      %147 = vector.multi_reduction <add>, %146, %cst_109 [1] : vector<4x2xf32> to vector<4xf32>
      %148 = vector.shape_cast %141 : vector<4xf32> to vector<1x4xf32>
      %149 = vector.shape_cast %144 : vector<4xf32> to vector<1x4xf32>
      %150 = vector.shape_cast %147 : vector<4xf32> to vector<1x4xf32>
      %151 = tpu.concatenate %148, %149, %150 in 0 : vector<1x4xf32>, vector<1x4xf32>, vector<1x4xf32> -> vector<3x4xf32>
      %152 = vector.shape_cast %151 : vector<3x4xf32> to vector<1x1x3x4xf32>
      %c0_110 = arith.constant 0 : index
      %c0_111 = arith.constant 0 : index
      %c0_112 = arith.constant 0 : index
      %c0_113 = arith.constant 0 : index
      %153 = vector.load %arg5[%c0_110, %c0_111, %c0_112, %c0_113] : memref<1x1x3x4xf32, #tpu.memory_space<vmem>>, vector<1x1x3x4xf32>
      tpu.vector_store %arg5[%c0_110, %c0_111, %c0_112, %c0_113], %152 {strides = array<i32>} : memref<1x1x3x4xf32, #tpu.memory_space<vmem>>, vector<1x1x3x4xf32>,
    } else {
    }
    return
  }
  func.func @transform_0(%arg0: i32, %arg1: i32, %arg2: i32) -> (i32, i32, i32, i32) {
    %c1_i32 = arith.constant 1 : i32
    %0 = arith.muli %arg1, %c1_i32 : i32
    %1 = arith.addi %0, %arg2 : i32
    %c0_i32 = arith.constant 0 : i32
    %2 = arith.minsi %1, %c0_i32 : i32
    %c0_i32_0 = arith.constant 0 : i32
    %c0_i32_1 = arith.constant 0 : i32
    %c0_i32_2 = arith.constant 0 : i32
    return %arg0, %c0_i32_0, %2, %c0_i32_1 : i32, i32, i32, i32
  }
  func.func @transform_1(%arg0: i32, %arg1: i32, %arg2: i32) -> (i32, i32, i32) {
    %c1_i32 = arith.constant 1 : i32
    %0 = arith.muli %arg1, %c1_i32 : i32
    %1 = arith.addi %0, %arg2 : i32
    %c0_i32 = arith.constant 0 : i32
    %2 = arith.minsi %1, %c0_i32 : i32
    %c0_i32_0 = arith.constant 0 : i32
    %c0_i32_1 = arith.constant 0 : i32
    return %arg0, %2, %c0_i32_0 : i32, i32, i32
  }
  func.func @transform_2(%arg0: i32, %arg1: i32, %arg2: i32) -> (i32, i32, i32, i32) {
    %c0_i32 = arith.constant 0 : i32
    %c0_i32_0 = arith.constant 0 : i32
    %c0_i32_1 = arith.constant 0 : i32
    return %arg0, %arg1, %c0_i32, %c0_i32_0 : i32, i32, i32, i32
  }
}

</mosaic_0001>

<llo_original>
// kernel: dice_loss.1
$region0: #{dice_loss.1}
  #allocation0 [shape = 'u32[]', space=smem, size = 0x4, offset = 0x4, fixed_abs, tag = 'smem constant byte address 0x4 - core index']
  #allocation1 [shape = 'u32[72,128]{1,0:T(1,128)}', space=vmem, size = 0x9000, scoped, tag = 'internal scratch']
  #allocation2 [shape = 'f32[4,2,128]{2,1,0:T(2,128)}', space=vmem, size = 0x1000, scoped, tag = 'scratch operand']
  #allocation3 [shape = 'f32[4,2,128]{2,1,0:T(2,128)}', space=vmem, size = 0x1000, scoped, tag = 'scratch operand']
  #allocation4 [shape = 'f32[4,2,128]{2,1,0:T(2,128)}', space=vmem, size = 0x1000, scoped, tag = 'scratch operand']
  %s0 = inlined_call_operand.vmem [shape: f32[2,4,2,128], index: 0, kind: input, shape index: {}]
  %s1 = inlined_call_operand.vmem [shape: s32[2,2,128], index: 1, kind: input, shape index: {}]
  %s2 = inlined_call_operand.vmem [shape: f32[2,1,3,4], index: 2, kind: output, shape index: {}]
  %s3 = sld [smem:[#allocation0]]
  $region49: #{dice_loss.1} parent=0
    _
  %s5 = ssub.s32 1, %s3
  %s6 = scalar_select 0, %s5, %s3
  loop: start=0, step=1, limit=4
  $region2: #{dice_loss.1} parent=0 // loop_pre_header
    _
  $region3: #{dice_loss.1} parent=0 // loop_header
    %s8 = sphi 0, %s12
    %p9 = scmp.ge.s32.totalorder %s8, 4
    %s15 = sphi 0, %s34
    %s16 = sphi 0, %s30
    %s17 = sphi 0, %s26
    %s18 = sphi 0, %s15
    %s19 = sphi 0, %s16
    %s20 = sphi 0, %s17
    %s21 = sphi 0, %s18
    %s22 = sphi 0, %s19
    %s23 = sphi 0, %s20
    %s45 = sphi 0, %s47
    %s48 = sphi 0, %s45
    %s49 = sphi 0, %s48
    %s65 = sphi 0, %s49
    %s79 = sphi 0, %s81
    %s82 = sphi 0, %s79
    %s83 = sphi 0, %s82
    %s99 = sphi 0, %s83
    %s107 = sphi 0, %s109
    %s110 = sphi 0, %s107
    %s111 = sphi 0, %s110
    %s127 = sphi 0, %s111
  $region4: #{dice_loss.1} parent=0 // loop_header_branch
    %11 = sbr.rel (%p9) target = $region8
  $region5: #{dice_loss.1} parent=0 // loop_body
    %s13 = ssub.s32 %s8, 1
    %s14 = ssub.s32 %s8, 2
    %s24 = sadd.s32 1, %s17
    %p25 = scmp.ge.s32.totalorder %s24, 1
    %s26 = scalar_select %p25, 0, %s24
    %s27 = sadd.s32 1, %s16
    %s28 = scalar_select %p25, %s27, %s16
    %p29 = scmp.ge.s32.totalorder %s28, 1
    %s30 = scalar_select %p29, 0, %s28
    %s31 = sadd.s32 1, %s15
    %s32 = scalar_select %p29, %s31, %s15
    %p33 = scmp.ge.s32.totalorder %s32, 2
    %s34 = scalar_select %p33, 0, %s32
    %s35 = sadd.s32 %s16, %s17
    %p36 = scmp.lt.s32.totalorder %s35, 0
    %s37 = scalar_select %p36, %s35, 0
    %s38 = sadd.s32 %s30, %s26
    %p39 = scmp.lt.s32.totalorder %s38, 0
    %s40 = scalar_select %p39, %s38, 0
    %s41 = ssub.s32 %s15, %s34
    %s42 = ssub.s32 %s37, %s40
    %s43 = sor.u32 %s41, %s42
    %p44 = scmp.eq.s32.totalorder %s43, 0
    %s46 = sadd.s32 %s45, 1
    %s47 = scalar_select %p44, %s45, %s46
    %p50 = pneg %p44
    %p51 = scmp.eq.s32.totalorder %s8, 1
    %p52 = por %p50, %p51
    %p53 = scmp.ne.s32.totalorder %s45, %s48
    %p54 = scmp.eq.s32.totalorder %s8, 0
    %p55 = por %p53, %p54
    %p56 = scmp.ne.s32.totalorder %s45, %s48
    %p57 = scmp.eq.s32.totalorder %s13, 1
    %p58 = por %p56, %p57
    %p59 = scmp.ne.s32.totalorder %s48, %s49
    %p60 = scmp.eq.s32.totalorder %s13, 0
    %p61 = por %p59, %p60
    %p62 = scmp.ne.s32.totalorder %s48, %s49
    %p63 = scmp.eq.s32.totalorder %s14, 1
    %p64 = por %p62, %p63
    %p66 = scmp.ne.s32.totalorder %s49, %s65
    %p67 = scmp.eq.s32.totalorder %s14, 0
    %p68 = por %p66, %p67
    %s69 = sadd.s32 %s16, %s17
    %p70 = scmp.lt.s32.totalorder %s69, 0
    %s71 = scalar_select %p70, %s69, 0
    %s72 = sadd.s32 %s30, %s26
    %p73 = scmp.lt.s32.totalorder %s72, 0
    %s74 = scalar_select %p73, %s72, 0
    %s75 = ssub.s32 %s15, %s34
    %s76 = ssub.s32 %s71, %s74
    %s77 = sor.u32 %s75, %s76
    %p78 = scmp.eq.s32.totalorder %s77, 0
    %s80 = sadd.s32 %s79, 1
    %s81 = scalar_select %p78, %s79, %s80
    %p84 = pneg %p78
    %p85 = scmp.eq.s32.totalorder %s8, 1
    %p86 = por %p84, %p85
    %p87 = scmp.ne.s32.totalorder %s79, %s82
    %p88 = scmp.eq.s32.totalorder %s8, 0
    %p89 = por %p87, %p88
    %p90 = scmp.ne.s32.totalorder %s79, %s82
    %p91 = scmp.eq.s32.totalorder %s13, 1
    %p92 = por %p90, %p91
    %p93 = scmp.ne.s32.totalorder %s82, %s83
    %p94 = scmp.eq.s32.totalorder %s13, 0
    %p95 = por %p93, %p94
    %p96 = scmp.ne.s32.totalorder %s82, %s83
    %p97 = scmp.eq.s32.totalorder %s14, 1
    %p98 = por %p96, %p97
    %p100 = scmp.ne.s32.totalorder %s83, %s99
    %p101 = scmp.eq.s32.totalorder %s14, 0
    %p102 = por %p100, %p101
    %s103 = ssub.s32 %s15, %s34
    %s104 = ssub.s32 %s16, %s30
    %s105 = sor.u32 %s103, %s104
    %p106 = scmp.eq.s32.totalorder %s105, 0
    %s108 = sadd.s32 %s107, 1
    %s109 = scalar_select %p106, %s107, %s108
    %p112 = pneg %p106
    %p113 = scmp.eq.s32.totalorder %s8, 1
    %p114 = por %p112, %p113
    %p115 = scmp.ne.s32.totalorder %s107, %s110
    %p116 = scmp.eq.s32.totalorder %s8, 0
    %p117 = por %p115, %p116
    %p118 = scmp.ne.s32.totalorder %s107, %s110
    %p119 = scmp.eq.s32.totalorder %s13, 1
    %p120 = por %p118, %p119
    %p121 = scmp.ne.s32.totalorder %s110, %s111
    %p122 = scmp.eq.s32.totalorder %s13, 0
    %p123 = por %p121, %p122
    %p124 = scmp.ne.s32.totalorder %s110, %s111
    %p125 = scmp.eq.s32.totalorder %s14, 1
    %p126 = por %p124, %p125
    %p128 = scmp.ne.s32.totalorder %s111, %s127
    %p129 = scmp.eq.s32.totalorder %s14, 0
    %p130 = por %p128, %p129
    %p131 = scmp.le.s32.totalorder 1, %s8
    %p132 = scmp.lt.s32.totalorder %s8, 3
    %p133 = pnand %p131, %p132
    %p134 = pneg %p133
    // Predicated region
    $region9: #{dice_loss.1} parent=5 // pred_check
      _
    $region10: #{dice_loss.1} parent=5 // pred_check_branch
      %136 = sbr.rel (%p133) target = $region12
    $region11: #{dice_loss.1} parent=5 // pred_region
      %s137 = ssub.s32 %s8, 1
    $region12: #{dice_loss.1} parent=5 // pred_fallthru
      _
    %p138 = scmp.lt.s32.totalorder %s8, 2
    // Predicated region
    $region13: #{dice_loss.1} parent=5 // pred_check
      %p139 = pneg %p138
    $region14: #{dice_loss.1} parent=5 // pred_check_branch
      %141 = sbr.rel (%p139) target = $region16
    $region15: #{dice_loss.1} parent=5 // pred_region
      // Predicated region
      $region17: #{dice_loss.1} parent=15 // pred_check
        %p142 = pneg %p55
      $region18: #{dice_loss.1} parent=15 // pred_check_branch
        %144 = sbr.rel (%p142) target = $region20
      $region19: #{dice_loss.1} parent=15 // pred_region
        %s145 = sadd.s32 %s16, %s17
        %p146 = scmp.lt.s32.totalorder %s145, 0
        %s147 = scalar_select %p146, %s145, 0
        %p148 = scmp.lt.s32.totalorder %s15, 1
        %s149 = scalar_select %p148, %s15, 1
        %p150 = scmp.lt.s32.totalorder %s147, 0
        %s151 = scalar_select %p150, %s147, 0
        %s152 = smul.addr %s149, 4
        %s153 = sadd.s32 %s151, %s152
        %s154 = smul.addr %s153, 2
        %s155 = scalar_lea.vmem %s0, %s154
        %s156 = sadd.s32 %s16, %s17
        %p157 = scmp.lt.s32.totalorder %s156, 0
        %s158 = scalar_select %p157, %s156, 0
      $region20: #{dice_loss.1} parent=15 // pred_fallthru
        _
      // Predicated region
      $region21: #{dice_loss.1} parent=15 // pred_check
        %p159 = pneg %p89
      $region22: #{dice_loss.1} parent=15 // pred_check_branch
        %161 = sbr.rel (%p159) target = $region24
      $region23: #{dice_loss.1} parent=15 // pred_region
        %s162 = sadd.s32 %s16, %s17
        %p163 = scmp.lt.s32.totalorder %s162, 0
        %s164 = scalar_select %p163, %s162, 0
        %p165 = scmp.lt.s32.totalorder %s15, 1
        %s166 = scalar_select %p165, %s15, 1
        %p167 = scmp.lt.s32.totalorder %s164, 0
        %s168 = scalar_select %p167, %s164, 0
        %s169 = sadd.s32 %s168, %s166
        %s170 = smul.addr %s169, 2
        %s171 = scalar_lea.vmem %s1, %s170
        %s172 = sadd.s32 %s16, %s17
        %p173 = scmp.lt.s32.totalorder %s172, 0
        %s174 = scalar_select %p173, %s172, 0
      $region24: #{dice_loss.1} parent=15 // pred_fallthru
        _
    $region16: #{dice_loss.1} parent=5 // pred_fallthru
      _
    %p175 = scmp.le.s32.totalorder 1, %s8
    %p176 = scmp.lt.s32.totalorder %s8, 3
    %p177 = pnand %p175, %p176
    %p178 = pneg %p177
    // Predicated region
    $region25: #{dice_loss.1} parent=5 // pred_check
      _
    $region26: #{dice_loss.1} parent=5 // pred_check_branch
      %180 = sbr.rel (%p177) target = $region28
    $region27: #{dice_loss.1} parent=5 // pred_region
      %s181 = ssub.s32 %s8, 1
      %s182 = sadd.s32 %s19, %s20
      %p183 = scmp.lt.s32.totalorder %s182, 0
      %s184 = scalar_select %p183, %s182, 0
      %p185 = scmp.lt.s32.totalorder %s18, 1
      %s186 = scalar_select %p185, %s18, 1
      %p187 = scmp.lt.s32.totalorder %s184, 0
      %s188 = scalar_select %p187, %s184, 0
      %s189 = smul.addr %s186, 4
      %s190 = sadd.s32 %s188, %s189
      %s191 = smul.addr %s190, 2
      %s192 = scalar_lea.vmem %s0, %s191
      %p193 = pneg %p61
      %p194 = pneg %p58
      %s195 = sadd.s32 %s19, %s20
      %p196 = scmp.lt.s32.totalorder %s195, 0
      %s197 = scalar_select %p196, %s195, 0
      %p198 = scmp.lt.s32.totalorder %s18, 1
      %s199 = scalar_select %p198, %s18, 1
      %p200 = scmp.lt.s32.totalorder %s197, 0
      %s201 = scalar_select %p200, %s197, 0
      %s202 = sadd.s32 %s201, %s199
      %s203 = smul.addr %s202, 2
      %s204 = scalar_lea.vmem %s1, %s203
      %p205 = pneg %p95
      %p206 = pneg %p92
      %p207 = pneg %p123
      %p208 = pneg %p120
      %p209 = scmp.lt.s32.totalorder %s18, 1
      %s210 = scalar_select %p209, %s18, 1
      %p211 = scmp.lt.s32.totalorder %s19, 0
      %s212 = scalar_select %p211, %s19, 0
      %s213 = sadd.s32 %s212, %s210
      %s214 = smul.addr %s213, 4
      %s215 = scalar_lea.vmem %s2, %s214
      %s216 = sadd.s32 %s19, %s20
      %p217 = scmp.lt.s32.totalorder %s216, 0
      %s218 = scalar_select %p217, %s216, 0
      %p219 = scmp.lt.s32.totalorder %s18, 1
      %s220 = scalar_select %p219, %s18, 1
      %p221 = scmp.lt.s32.totalorder %s218, 0
      %s222 = scalar_select %p221, %s218, 0
      %s223 = smul.addr %s220, 4
      %s224 = sadd.s32 %s222, %s223
      %s225 = smul.addr %s224, 2
      %s226 = scalar_lea.vmem %s0, %s225
      %s227 = sadd.s32 %s19, %s20
      %p228 = scmp.lt.s32.totalorder %s227, 0
      %s229 = scalar_select %p228, %s227, 0
      %s230 = sadd.s32 %s19, %s20
      %p231 = scmp.lt.s32.totalorder %s230, 0
      %s232 = scalar_select %p231, %s230, 0
      %p233 = scmp.lt.s32.totalorder %s18, 1
      %s234 = scalar_select %p233, %s18, 1
      %p235 = scmp.lt.s32.totalorder %s232, 0
      %s236 = scalar_select %p235, %s232, 0
      %s237 = sadd.s32 %s236, %s234
      %s238 = smul.addr %s237, 2
      %s239 = scalar_lea.vmem %s1, %s238
      %s240 = sadd.s32 %s19, %s20
      %p241 = scmp.lt.s32.totalorder %s240, 0
      %s242 = scalar_select %p241, %s240, 0
      %p243 = scmp.lt.s32.totalorder %s18, 1
      %s244 = scalar_select %p243, %s18, 1
      %p245 = scmp.lt.s32.totalorder %s19, 0
      %s246 = scalar_select %p245, %s19, 0
      %s247 = sadd.s32 %s246, %s244
      %s248 = smul.addr %s247, 4
      %s249 = scalar_lea.vmem %s2, %s248
      %p250 = scmp.eq.s32.totalorder %s20, 0
      // Predicated region
      $region29: #{dice_loss.1} parent=27 // pred_check
        %p251 = pneg %p250
      $region30: #{dice_loss.1} parent=27 // pred_check_branch
        %253 = sbr.rel (%p251) target = $region32
      $region31: #{dice_loss.1} parent=27 // pred_region
        %254 = vst [vmem:[#allocation2] sm:$0x3] 0.0
        %255 = vst [vmem:[#allocation2 + $0x2] sm:$0x3] 0.0
        %256 = vst [vmem:[#allocation2 + $0x4] sm:$0x3] 0.0
        %257 = vst [vmem:[#allocation2 + $0x6] sm:$0x3] 0.0
        %258 = vst [vmem:[#allocation3] sm:$0x3] 0.0
        %259 = vst [vmem:[#allocation3 + $0x2] sm:$0x3] 0.0
        %260 = vst [vmem:[#allocation3 + $0x4] sm:$0x3] 0.0
        %261 = vst [vmem:[#allocation3 + $0x6] sm:$0x3] 0.0
        %262 = vst [vmem:[#allocation4] sm:$0x3] 0.0
        %263 = vst [vmem:[#allocation4 + $0x2] sm:$0x3] 0.0
        %264 = vst [vmem:[#allocation4 + $0x4] sm:$0x3] 0.0
        %265 = vst [vmem:[#allocation4 + $0x6] sm:$0x3] 0.0
      $region32: #{dice_loss.1} parent=27 // pred_fallthru
        _
      %v266 = vld [vmem:[#allocation2] sm:$0x3]
      %s267 = scalar_lea.vmem [#allocation2], 2
      %v268 = vld [vmem:[%s267] sm:$0x3]
      %s269 = scalar_lea.vmem [#allocation2], 4
      %v270 = vld [vmem:[%s269] sm:$0x3]
      %s271 = scalar_lea.vmem [#allocation2], 6
      %v272 = vld [vmem:[%s271] sm:$0x3]
      %v273 = vld [vmem:[#allocation3] sm:$0x3]
      %s274 = scalar_lea.vmem [#allocation3], 2
      %v275 = vld [vmem:[%s274] sm:$0x3]
      %s276 = scalar_lea.vmem [#allocation3], 4
      %v277 = vld [vmem:[%s276] sm:$0x3]
      %s278 = scalar_lea.vmem [#allocation3], 6
      %v279 = vld [vmem:[%s278] sm:$0x3]
      %v280 = vld [vmem:[#allocation4] sm:$0x3]
      %s281 = scalar_lea.vmem [#allocation4], 2
      %v282 = vld [vmem:[%s281] sm:$0x3]
      %s283 = scalar_lea.vmem [#allocation4], 4
      %v284 = vld [vmem:[%s283] sm:$0x3]
      %s285 = scalar_lea.vmem [#allocation4], 6
      %v286 = vld [vmem:[%s285] sm:$0x3]
      %v287 = vld [vmem:[%s239] sm:$0x3]
      %v288 = vld [vmem:[%s226] sm:$0x3]
      %s289 = scalar_lea.vmem %s226, 2
      %v290 = vld [vmem:[%s289] sm:$0x3]
      %s291 = scalar_lea.vmem %s226, 4
      %v292 = vld [vmem:[%s291] sm:$0x3]
      %s293 = scalar_lea.vmem %s226, 6
      %v294 = vld [vmem:[%s293] sm:$0x3]
      %v295 = vmax.f32 %v288, %v290
      %v296 = vmax.f32 %v295, %v292
      %v297 = vmax.f32 %v296, %v294
      %v298 = vsub.f32 %v288, %v297
      %v299 = vmul.f32 %v298, 1.442695
      %v300 = vpow.pop %v299
      %v301 = vsub.f32 %v290, %v297
      %v302 = vmul.f32 %v301, 1.442695
      %v303 = vpow.pop %v302
      %v304 = vsub.f32 %v292, %v297
      %v305 = vmul.f32 %v304, 1.442695
      %v306 = vpow.pop %v305
      %v307 = vsub.f32 %v294, %v297
      %v308 = vmul.f32 %v307, 1.442695
      %v309 = vpow.pop %v308
      %v310 = vadd.f32 %v300, %v303
      %v311 = vadd.f32 %v310, %v306
      %v312 = vadd.f32 %v311, %v309
      %v313 = vrcp.pop %v312
      %v314 = vmul.f32 %v312, %v313
      %v315 = vsub.f32 2.0, %v314
      %v316 = vmul.f32 %v313, %v315
      %v317 = vmul.f32 %v300, %v316
      %vm318 = vcmp.eq.s32.totalorder %v287, 0
      %v319 = vmul.f32 %v317, %v317
      %v320 = vsel %vm318, %v317, 0.0
      %v321 = vsel %vm318, 1, 0
      %v322 = vcvt.s32.f32 %v321
      %v323 = vadd.f32 %v266, %v320
      %v324 = vadd.f32 %v273, %v319
      %v325 = vadd.f32 %v280, %v322
      %v326 = vmul.f32 %v303, %v316
      %vm327 = vcmp.eq.s32.totalorder %v287, 1
      %v328 = vmul.f32 %v326, %v326
      %v329 = vsel %vm327, %v326, 0.0
      %v330 = vsel %vm327, 1, 0
      %v331 = vcvt.s32.f32 %v330
      %v332 = vadd.f32 %v268, %v329
      %v333 = vadd.f32 %v275, %v328
      %v334 = vadd.f32 %v282, %v331
      %v335 = vmul.f32 %v306, %v316
      %vm336 = vcmp.eq.s32.totalorder %v287, 2
      %v337 = vmul.f32 %v335, %v335
      %v338 = vsel %vm336, %v335, 0.0
      %v339 = vsel %vm336, 1, 0
      %v340 = vcvt.s32.f32 %v339
      %v341 = vadd.f32 %v270, %v338
      %v342 = vadd.f32 %v277, %v337
      %v343 = vadd.f32 %v284, %v340
      %v344 = vmul.f32 %v309, %v316
      %vm345 = vcmp.eq.s32.totalorder %v287, 3
      %v346 = vmul.f32 %v344, %v344
      %v347 = vsel %vm345, %v344, 0.0
      %v348 = vsel %vm345, 1, 0
      %v349 = vcvt.s32.f32 %v348
      %v350 = vadd.f32 %v272, %v347
      %v351 = vadd.f32 %v279, %v346
      %v352 = vadd.f32 %v286, %v349
      %353 = vst [vmem:[#allocation2] sm:$0x3] %v323
      %354 = vst [vmem:[#allocation3] sm:$0x3] %v324
      %355 = vst [vmem:[#allocation4] sm:$0x3] %v325
      %356 = vst [vmem:[%s267] sm:$0x3] %v332
      %357 = vst [vmem:[%s274] sm:$0x3] %v333
      %358 = vst [vmem:[%s281] sm:$0x3] %v334
      %359 = vst [vmem:[%s269] sm:$0x3] %v341
      %360 = vst [vmem:[%s276] sm:$0x3] %v342
      %361 = vst [vmem:[%s283] sm:$0x3] %v343
      %362 = vst [vmem:[%s271] sm:$0x3] %v350
      %363 = vst [vmem:[%s278] sm:$0x3] %v351
      %364 = vst [vmem:[%s285] sm:$0x3] %v352
      // Predicated region
      $region33: #{dice_loss.1} parent=27 // pred_check
        %p365 = pneg %p250
      $region34: #{dice_loss.1} parent=27 // pred_check_branch
        %367 = sbr.rel (%p365) target = $region36
      $region35: #{dice_loss.1} parent=27 // pred_region
        %v368 = vld [vmem:[#allocation2] sm:$0x3]
        %v369 = vld [vmem:[#allocation2 + $0x2] sm:$0x3]
        %v370 = vld [vmem:[#allocation2 + $0x4] sm:$0x3]
        %v371 = vld [vmem:[#allocation2 + $0x6] sm:$0x3]
        %vm372 = vcmask 1041408
        %v373 = vsel %vm372, %v368, 0.0
        %374 = vadd.xlane.f32.xlu0 %v373
        %v375 = vpop.xlane.xlu0 %374
        %v376 = vsel %vm372, %v369, 0.0
        %377 = vadd.xlane.f32.xlu0 %v376
        %v378 = vpop.xlane.xlu0 %377
        %v379 = vsel %vm372, %v370, 0.0
        %380 = vadd.xlane.f32.xlu0 %v379
        %v381 = vpop.xlane.xlu0 %380
        %v382 = vsel %vm372, %v371, 0.0
        %383 = vadd.xlane.f32.xlu0 %v382
        %v384 = vpop.xlane.xlu0 %383
        %v389 = vlaneseq
        %v390 = vand.u32 %v389, 127
        %v391 = vperm.slane %v375, %v390
        %v392 = vperm.slane %v378, %v390
        %v393 = vperm.slane %v381, %v390
        %v394 = vperm.slane %v384, %v390
        %vm395 = vcmask 1041409
        %v396 = vsel %vm395, %v392, %v391
        %vm397 = vcmask 1042434
        %v398 = vsel %vm397, %v393, %v396
        %vm399 = vcmask 1043459
        %v400 = vsel %vm399, %v394, %v398
        %vm402 = vcmask 11264
        %v403 = vsel %vm402, %v400, 0.0
        %404 = vadd.xlane.f32.xlu0 %v403
        %v405 = vpop.xlane.xlu0 %404
        %v406 = vld [vmem:[#allocation3] sm:$0x3]
        %v407 = vld [vmem:[#allocation3 + $0x2] sm:$0x3]
        %v408 = vld [vmem:[#allocation3 + $0x4] sm:$0x3]
        %v409 = vld [vmem:[#allocation3 + $0x6] sm:$0x3]
        %v410 = vsel %vm372, %v406, 0.0
        %411 = vadd.xlane.f32.xlu0 %v410
        %v412 = vpop.xlane.xlu0 %411
        %v413 = vsel %vm372, %v407, 0.0
        %414 = vadd.xlane.f32.xlu0 %v413
        %v415 = vpop.xlane.xlu0 %414
        %v416 = vsel %vm372, %v408, 0.0
        %417 = vadd.xlane.f32.xlu0 %v416
        %v418 = vpop.xlane.xlu0 %417
        %v419 = vsel %vm372, %v409, 0.0
        %420 = vadd.xlane.f32.xlu0 %v419
        %v421 = vpop.xlane.xlu0 %420
        %v426 = vperm.slane %v412, %v390
        %v427 = vperm.slane %v415, %v390
        %v428 = vperm.slane %v418, %v390
        %v429 = vperm.slane %v421, %v390
        %v430 = vsel %vm395, %v427, %v426
        %v431 = vsel %vm397, %v428, %v430
        %v432 = vsel %vm399, %v429, %v431
        %v434 = vsel %vm402, %v432, 0.0
        %435 = vadd.xlane.f32.xlu0 %v434
        %v436 = vpop.xlane.xlu0 %435
        %v437 = vld [vmem:[#allocation4] sm:$0x3]
        %v438 = vld [vmem:[#allocation4 + $0x2] sm:$0x3]
        %v439 = vld [vmem:[#allocation4 + $0x4] sm:$0x3]
        %v440 = vld [vmem:[#allocation4 + $0x6] sm:$0x3]
        %v441 = vsel %vm372, %v437, 0.0
        %442 = vadd.xlane.f32.xlu0 %v441
        %v443 = vpop.xlane.xlu0 %442
        %v444 = vsel %vm372, %v438, 0.0
        %445 = vadd.xlane.f32.xlu0 %v444
        %v446 = vpop.xlane.xlu0 %445
        %v447 = vsel %vm372, %v439, 0.0
        %448 = vadd.xlane.f32.xlu0 %v447
        %v449 = vpop.xlane.xlu0 %448
        %v450 = vsel %vm372, %v440, 0.0
        %451 = vadd.xlane.f32.xlu0 %v450
        %v452 = vpop.xlane.xlu0 %451
        %v457 = vperm.slane %v443, %v390
        %v458 = vperm.slane %v446, %v390
        %v459 = vperm.slane %v449, %v390
        %v460 = vperm.slane %v452, %v390
        %v461 = vsel %vm395, %v458, %v457
        %v462 = vsel %vm397, %v459, %v461
        %v463 = vsel %vm399, %v460, %v462
        %v465 = vsel %vm402, %v463, 0.0
        %466 = vadd.xlane.f32.xlu0 %v465
        %v467 = vpop.xlane.xlu0 %466
        %v469 = vperm.slane %v405, %v390
        %v472 = vperm.slane %v436, %v390
        %v475 = vperm.slane %v467, %v390
        %vm477 = vcmask 1040384
        %v478 = vsel %vm477, %v469, %v472
        %v479 = vsel %vm372, %v478, %v475
        %vm480 = vcmask 26624
        %481 = vst.msk [vmem:[%s249] sm:$0x7] %vm480, %v479
      $region36: #{dice_loss.1} parent=27 // pred_fallthru
        _
      %p482 = scmp.lt.s32.totalorder %s18, 1
      %s483 = scalar_select %p482, %s18, 1
      %p484 = scmp.lt.s32.totalorder %s19, 0
      %s485 = scalar_select %p484, %s19, 0
      %s486 = sadd.s32 %s485, %s483
      %s487 = smul.addr %s486, 4
      %s488 = scalar_lea.vmem %s2, %s487
      // Predicated region
      $region37: #{dice_loss.1} parent=27 // pred_check
        %p489 = pneg %p120
      $region38: #{dice_loss.1} parent=27 // pred_check_branch
        %491 = sbr.rel (%p489) target = $region40
      $region39: #{dice_loss.1} parent=27 // pred_region
        _
      $region40: #{dice_loss.1} parent=27 // pred_fallthru
        _
    $region28: #{dice_loss.1} parent=5 // pred_fallthru
      _
    %p492 = scmp.le.s32.totalorder 2, %s8
    // Predicated region
    $region41: #{dice_loss.1} parent=5 // pred_check
      %p493 = pneg %p492
    $region42: #{dice_loss.1} parent=5 // pred_check_branch
      %495 = sbr.rel (%p493) target = $region44
    $region43: #{dice_loss.1} parent=5 // pred_region
      %s496 = ssub.s32 %s8, 2
      // Predicated region
      $region45: #{dice_loss.1} parent=43 // pred_check
        %p497 = pneg %p126
      $region46: #{dice_loss.1} parent=43 // pred_check_branch
        %499 = sbr.rel (%p497) target = $region48
      $region47: #{dice_loss.1} parent=43 // pred_region
        %p500 = scmp.lt.s32.totalorder %s21, 1
        %s501 = scalar_select %p500, %s21, 1
        %p502 = scmp.lt.s32.totalorder %s22, 0
        %s503 = scalar_select %p502, %s22, 0
        %s504 = sadd.s32 %s503, %s501
        %s505 = smul.addr %s504, 4
        %s506 = scalar_lea.vmem %s2, %s505
      $region48: #{dice_loss.1} parent=43 // pred_fallthru
        _
    $region44: #{dice_loss.1} parent=5 // pred_fallthru
      _
  $region6: #{dice_loss.1} parent=0 // loop_footer
    %s12 = sadd.s32 1, %s8
  $region7: #{dice_loss.1} parent=0 // loop_footer_branch
    %7 = sbr.rel target = $region3
  $region8: #{dice_loss.1} parent=0 // loop_exit
    _

</llo_original>
